<compile_context>
chip_gen: v5e
topology: v5e:2x2
jax: 0.10.0
libtpu: 0.0.40
codegen_flags: <defaults>
</compile_context>

<pallas_src>
import functools

import jax
import jax.numpy as jnp
from jax.experimental import pallas as pl
from jax.experimental.pallas import tpu as pltpu


def _round_up(v, m):
    return (v + m - 1) // m * m


def _pick_tile(n, target=256):
    """Largest divisor of n that is a multiple of 16 (bf16 sublane tiling) and <= target."""
    best = None
    for t in range(16, min(n, target) + 1, 16):
        if n % t == 0:
            best = t
    return best or n


# --------------------------------------------------------------------------
# Kernel 1: fused projection  proj = x @ W_fused   (bf16 MXU, f32 accumulate)
# --------------------------------------------------------------------------
def _proj_kernel(x_ref, w_ref, o_ref):
    o_ref[...] = jnp.dot(x_ref[...].astype(jnp.bfloat16), w_ref[...],
                         preferred_element_type=jnp.float32)


# --------------------------------------------------------------------------
# Kernel 2: masked attention softmax + aggregation + skip + bias + ELU,
#           tiled over destination-node rows.
# --------------------------------------------------------------------------
def _attn_kernel(adj_ref, xp_ref, asrc_ref, adst_ref, skip_ref, bias_ref,
                 out_ref, *, heads, ch, out_dim, out_p, concat, apply_elu):
    tile = out_ref.shape[0]

    # Additive adjacency mask (0 / -1e30), loaded once per tile, shared by all
    # heads (hoisted out of the head loop).
    mask_bias = adj_ref[...].astype(jnp.float32)          # [T, N_src]
    a_src = asrc_ref[...]                                 # [H, N_src]  f32
    a_dst = adst_ref[...]                                 # [T, H]      f32

    head_outs = []
    # TODO(synk): for large head counts switch to lax.fori_loop over the head
    # axis so only one [T, N] logits tile is live; H=2 unrolls fine.
    for h in range(heads):
        # e[i, j] = LeakyReLU(a_dst[i] + a_src[j], 0.2) + mask
        e = a_dst[:, h:h + 1] + a_src[h:h + 1, :]         # [T, N_src]
        e = jnp.maximum(e, 0.2 * e)
        e = e + mask_bias
        m = jnp.max(e, axis=-1, keepdims=True)
        p = jnp.exp(e - m)                                # [T, N_src]  f32
        denom = jnp.sum(p, axis=-1, keepdims=True)        # XLU reduce (f32)
        agg = jnp.dot(p.astype(jnp.bfloat16), xp_ref[h],  # MXU [T,N]@[N,C]
                      preferred_element_type=jnp.float32)
        head_outs.append(agg * pl.reciprocal(denom, approx=True))

    if concat:
        gat = jnp.concatenate(head_outs, axis=-1)         # [T, H*C]
    else:
        gat = head_outs[0]
        for ho in head_outs[1:]:
            gat = gat + ho
        gat = gat * (1.0 / heads)                         # [T, C]

    out = gat + skip_ref[...]                             # [T, out_dim]
    pad = out_p - out_dim
    if pad:
        out = jnp.concatenate(
            [out, jnp.zeros((tile, pad), jnp.float32)], axis=-1)   # lane-dense
    out = out + bias_ref[...]                             # GATConv bias + skip bias
    if apply_elu:
        out = jnp.where(out > 0, out, jnp.exp(jnp.minimum(out, 0.0)) - 1.0)
    out_ref[...] = out


# --------------------------------------------------------------------------
# Parameter handling / wrappers
# --------------------------------------------------------------------------
def init_params(key, in_channels, hidden_channels, out_channels, num_layers, heads):
    """Deterministic synthetic parameters matching GAT.__init__ shapes."""
    layers = []
    f_ins = [in_channels] + [heads * hidden_channels] * (num_layers - 1)
    for i in range(num_layers):
        last = (i == num_layers - 1)
        c = out_channels if last else hidden_channels
        f_in = f_ins[i]
        out_dim = out_channels if last else heads * hidden_channels
        key, k0, k1, k2, k3, k4, k5 = jax.random.split(key, 7)
        layers.append(dict(
            w=0.1 * jax.random.normal(k0, (heads, f_in, c), jnp.float32),
            att_src=0.1 * jax.random.normal(k1, (heads, c), jnp.float32),
            att_dst=0.1 * jax.random.normal(k2, (heads, c), jnp.float32),
            bias=0.1 * jax.random.normal(k3, (1, out_dim), jnp.float32),
            w_skip=0.1 * jax.random.normal(k4, (f_in, out_dim), jnp.float32),
            b_skip=0.1 * jax.random.normal(k5, (1, out_dim), jnp.float32),
        ))
    return layers


def fuse_layer(p, heads):
    """Fuse per-head W, skip W, and attention vectors into one wide bf16 weight."""
    w = p["w"]                                      # [H, F_in, C]
    h, f_in, c = w.shape
    w_skip = p["w_skip"]                            # [F_in, out_dim]
    out_dim = w_skip.shape[1]
    f_pad = _round_up(f_in, 128)

    w_heads = jnp.transpose(w, (1, 0, 2)).reshape(f_in, h * c)       # [F_in, H*C]
    asrc_cols = jnp.einsum('hfc,hc->fh', w, p["att_src"])            # [F_in, H]  (W_h @ a_src_h)
    adst_cols = jnp.einsum('hfc,hc->fh', w, p["att_dst"])            # [F_in, H]
    w_all = jnp.concatenate([w_heads, w_skip, asrc_cols, adst_cols], axis=1)
    used = h * c + out_dim + 2 * h
    p_cols = _round_up(used, 128)
    w_all = jnp.pad(w_all, ((0, f_pad - f_in), (0, p_cols - used))).astype(jnp.bfloat16)

    out_p = _round_up(out_dim, 128)
    bias = jnp.pad((p["bias"] + p["b_skip"]).reshape(1, out_dim),
                   ((0, 0), (0, out_p - out_dim))).astype(jnp.float32)

    return dict(w_all=w_all, bias=bias, c=c, out_dim=out_dim, f_pad=f_pad,
                p_cols=p_cols, out_p=out_p,
                skip_off=h * c, asrc_off=h * c + out_dim, adst_off=h * c + out_dim + h)


def gat_layer(x_pad, adj_bias, fp, *, heads, concat, apply_elu,
              tile_rows=None, tile_dst=None):
    n = x_pad.shape[0]
    f_pad, p_cols, out_p = fp["f_pad"], fp["p_cols"], fp["out_p"]
    ch, out_dim = fp["c"], fp["out_dim"]
    assert x_pad.shape[1] == f_pad
    tile_rows = tile_rows or _pick_tile(n)
    tile_dst = tile_dst or _pick_tile(n)

    # ---- kernel 1: fused projection (row-tiled, both TCs via "parallel") ----
    proj = pl.pallas_call(
        _proj_kernel,
        out_shape=jax.ShapeDtypeStruct((n, p_cols), jnp.float32),
        grid=(n // tile_rows,),
        in_specs=[pl.BlockSpec((tile_rows, f_pad), lambda i: (i, 0)),
                  pl.BlockSpec((f_pad, p_cols), lambda i: (0, 0))],
        out_specs=pl.BlockSpec((tile_rows, p_cols), lambda i: (i, 0)),
        compiler_params=pltpu.CompilerParams(dimension_semantics=("parallel",)),
    )(x_pad, fp["w_all"])

    # Layout plumbing in XLA (small slices/transposes) so the attention kernel
    # never does unaligned lane slicing: per-head value slabs head-major, and
    # per-source logits lane-oriented.
    xp3 = jnp.transpose(proj[:, :heads * ch].reshape(n, heads, ch),
                        (1, 0, 2)).astype(jnp.bfloat16)                      # [H, N, C]
    a_src = jnp.transpose(proj[:, fp["asrc_off"]:fp["asrc_off"] + heads])    # [H, N]
    a_dst = proj[:, fp["adst_off"]:fp["adst_off"] + heads]                   # [N, H]
    skip = proj[:, fp["skip_off"]:fp["skip_off"] + out_dim]                  # [N, out_dim]

    kernel = functools.partial(
        _attn_kernel, heads=heads, ch=ch, out_dim=out_dim, out_p=out_p,
        concat=concat, apply_elu=apply_elu)

    # ---- kernel 2: attention / aggregation, tiled over destination rows ----
    out = pl.pallas_call(
        kernel,
        out_shape=jax.ShapeDtypeStruct((n, out_p), jnp.float32),
        grid=(n // tile_dst,),
        in_specs=[pl.BlockSpec((tile_dst, n), lambda i: (i, 0)),         # adj mask (bf16, streamed)
                  pl.BlockSpec((heads, n, ch), lambda i: (0, 0, 0)),     # per-head values (resident)
                  pl.BlockSpec((heads, n), lambda i: (0, 0)),            # a_src transposed (resident)
                  pl.BlockSpec((tile_dst, heads), lambda i: (i, 0)),     # a_dst (streamed)
                  pl.BlockSpec((tile_dst, out_dim), lambda i: (i, 0)),   # skip (streamed)
                  pl.BlockSpec((1, out_p), lambda i: (0, 0))],           # fused bias (resident)
        out_specs=pl.BlockSpec((tile_dst, out_p), lambda i: (i, 0)),
        compiler_params=pltpu.CompilerParams(dimension_semantics=("parallel",)),
    )(adj_bias, xp3, a_src, a_dst, skip, fp["bias"])
    return out


def gat_forward(x, adj_bias, layers_fused, *, heads, out_channels,
                tile_rows=None, tile_dst=None):
    num_layers = len(layers_fused)
    # Pad input features to a lane-dense width once.
    f_pad0 = layers_fused[0]["f_pad"]
    x = jnp.pad(x, ((0, 0), (0, f_pad0 - x.shape[1])))
    for i, fp in enumerate(layers_fused):
        last = (i == num_layers - 1)
        x = gat_layer(x, adj_bias, fp, heads=heads, concat=not last,
                      apply_elu=not last, tile_rows=tile_rows, tile_dst=tile_dst)
        # TODO(synk): F.dropout(p=0.5, training=self.training) is identity in
        # eval mode (training=False), so it is intentionally omitted here.
        if not last:
            fn = layers_fused[i + 1]["f_pad"]
            if x.shape[1] > fn:
                x = x[:, :fn]
            elif x.shape[1] < fn:
                x = jnp.pad(x, ((0, 0), (0, fn - x.shape[1])))
    return x[:, :out_channels]


def edge_index_to_adj_bias(edge_index, num_nodes):
    """Additive attention mask: 0 for edge src->dst (incl. self loops), -1e30 otherwise.
    Stored bf16 to halve HBM traffic; reused by every layer."""
    src, dst = edge_index[0], edge_index[1]
    adj = jnp.zeros((num_nodes, num_nodes), jnp.float32).at[dst, src].set(1.0)
    adj = jnp.maximum(adj, jnp.eye(num_nodes, dtype=jnp.float32))
    return jnp.where(adj > 0, 0.0, -1e30).astype(jnp.bfloat16)


if __name__ == "__main__":
    # Small shapes consistent with the module: GAT(in=32, hidden=16, out=8,
    # num_layers=3, heads=2) on a 64-node graph with 256 random edges.
    N, IN_CH, HIDDEN, OUT_CH, LAYERS, HEADS, E = 64, 32, 16, 8, 3, 2, 256

    key = jax.random.PRNGKey(0)
    kx, ke_src, ke_dst, kp = jax.random.split(key, 4)

    x = jax.random.normal(kx, (N, IN_CH), jnp.float32)
    edge_index = jnp.stack([
        jax.random.randint(ke_src, (E,), 0, N),
        jax.random.randint(ke_dst, (E,), 0, N),
    ])
    adj_bias = edge_index_to_adj_bias(edge_index, N)

    params = init_params(kp, IN_CH, HIDDEN, OUT_CH, LAYERS, HEADS)
    fused = [fuse_layer(p, HEADS) for p in params]

    # tile=32 exercises the dst/row grids (grid=(2,)) even at this toy size.
    out = gat_forward(x, adj_bias, fused, heads=HEADS, out_channels=OUT_CH,
                      tile_rows=32, tile_dst=32)
    jax.block_until_ready(out)

    assert out.shape == (N, OUT_CH), out.shape
    assert bool(jnp.all(jnp.isfinite(out)))
    print("KERNEL_OK")
</pallas_src>

<mosaic_0001>
module attributes {stable_mosaic.version = 11 : i64} {
  func.func @_proj_kernel(%arg0: i32, %arg1: memref<32x128xf32, #tpu.memory_space<vmem>>, %arg2: memref<128x128xbf16, #tpu.memory_space<vmem>>, %arg3: memref<32x128xf32, #tpu.memory_space<vmem>>) attributes {dimension_semantics = [#tpu.dimension_semantics<parallel>], iteration_bounds = array<i64: 2>, scalar_prefetch = 0 : i64, scratch_operands = 0 : i64, tpu.core_type = #tpu.core_type<tc>, window_params = [{transform_indices = @transform_0, window_bounds = array<i64: 32, 128>}, {pipeline_mode = #tpu.pipeline_mode<synchronous>, transform_indices = @transform_1, window_bounds = array<i64: 128, 128>}, {transform_indices = @transform_2, window_bounds = array<i64: 32, 128>}]} {
    %c0 = arith.constant 0 : index
    %c0_0 = arith.constant 0 : index
    %0 = vector.load %arg1[%c0, %c0_0] : memref<32x128xf32, #tpu.memory_space<vmem>>, vector<32x128xf32>
    %1 = arith.truncf %0 : vector<32x128xf32> to vector<32x128xbf16>
    %c0_1 = arith.constant 0 : index
    %c0_2 = arith.constant 0 : index
    %2 = vector.load %arg2[%c0_1, %c0_2] : memref<128x128xbf16, #tpu.memory_space<vmem>>, vector<128x128xbf16>
    %cst = arith.constant dense<0.000000e+00> : vector<32x128xf32>
    %3 = tpu.matmul %1, %2, %cst {dimension_numbers = #tpu.dot_dimension_numbers<[1], [0], [0], [1], [0, 0, 1, 1], [], []>} : vector<32x128xbf16>, vector<128x128xbf16>, vector<32x128xf32> -> vector<32x128xf32>
    %c0_3 = arith.constant 0 : index
    %c0_4 = arith.constant 0 : index
    %4 = vector.load %arg3[%c0_3, %c0_4] : memref<32x128xf32, #tpu.memory_space<vmem>>, vector<32x128xf32>
    tpu.vector_store %arg3[%c0_3, %c0_4], %3 {strides = array<i32>} : memref<32x128xf32, #tpu.memory_space<vmem>>, vector<32x128xf32>,
    return
  }
  func.func @transform_0(%arg0: i32) -> (i32, i32) {
    %c0_i32 = arith.constant 0 : i32
    %c0_i32_0 = arith.constant 0 : i32
    return %arg0, %c0_i32 : i32, i32
  }
  func.func @transform_1(%arg0: i32) -> (i32, i32) {
    %c0_i32 = arith.constant 0 : i32
    %c0_i32_0 = arith.constant 0 : i32
    %c0_i32_1 = arith.constant 0 : i32
    return %c0_i32, %c0_i32_0 : i32, i32
  }
  func.func @transform_2(%arg0: i32) -> (i32, i32) {
    %c0_i32 = arith.constant 0 : i32
    %c0_i32_0 = arith.constant 0 : i32
    return %arg0, %c0_i32 : i32, i32
  }
}

</mosaic_0001>

<llo_original>
// kernel: tpu_custom_call.1
$region0: #{tpu_custom_call.1}
  #allocation0 [shape = 'u32[]', space=smem, size = 0x4, offset = 0x4, fixed_abs, tag = 'smem constant byte address 0x4 - core index']
  #allocation1 [shape = 'u32[72,128]{1,0:T(1,128)}', space=vmem, size = 0x9000, scoped, tag = 'internal scratch']
  %s0 = inlined_call_operand.hbm [shape: f32[64,128], index: 0, kind: input, shape index: {}]
  %s1 = inlined_call_operand.hbm [shape: bf16[128,128], index: 1, kind: input, shape index: {}]
  %s2 = inlined_call_operand.hbm [shape: f32[64,128], index: 2, kind: output, shape index: {}]
  %s3 = sld [smem:[#allocation0]]
  $region49: #{tpu_custom_call.1} parent=0
    _
  %s5 = ssub.s32 1, %s3
  %s6 = scalar_select 0, %s5, %s3
  $region1: #{tpu_custom_call.1} parent=0
    #allocation2 [shape = 'u8[32768]{0}', space=vmem, size = 0x8000, scoped, tag = 'input window, operand 0']
    #allocation3 [shape = 's32[2]{0}', space=sflag, size = 0x8, scoped, tag = 'scoped memory for tpu_custom_call.1']
    #allocation4 [shape = 's32[2]{0}', space=sflag, size = 0x8, scoped, tag = 'scoped memory for tpu_custom_call.1']
    #allocation5 [shape = 'u8[32768]{0}', space=vmem, size = 0x8000, scoped, tag = 'input window, operand 1, single buffered']
    #allocation6 [shape = 's32[1]{0}', space=sflag, size = 0x4, scoped, tag = 'scoped memory for tpu_custom_call.1']
    #allocation7 [shape = 'u8[32768]{0}', space=vmem, size = 0x8000, scoped, tag = 'output window, operand 0']
    %7 = vsyncpa [#allocation3], 0
    %s8 = scalar_lea.sflag [#allocation3], 1
    %9 = vsyncpa %s8, 0
    %10 = vsyncpa [#allocation6], 0
    %11 = vsyncpa [#allocation4], 0
    %s12 = scalar_lea.sflag [#allocation4], 1
    %13 = vsyncpa %s12, 0
    loop: start=0, step=1, limit=4
    $region2: #{tpu_custom_call.1} parent=1 // loop_pre_header
      _
    $region3: #{tpu_custom_call.1} parent=1 // loop_header
      %s15 = sphi 0, %s19
      %p16 = scmp.ge.s32.totalorder %s15, 4
      %s25 = sphi 0, %s27
      %s28 = sphi 0, %s25
      %s29 = sphi 0, %s28
      %s45 = sphi 0, %s29
      %s49 = sphi 0, %s49
      %s51 = sphi 0, %s49
      %s52 = sphi 0, %s51
      %s66 = sphi 0, %s52
      %s72 = sphi 0, %s74
      %s75 = sphi 0, %s72
      %s76 = sphi 0, %s75
      %s92 = sphi 0, %s76
    $region4: #{tpu_custom_call.1} parent=1 // loop_header_branch
      %18 = sbr.rel (%p16) target = $region8
    $region5: #{tpu_custom_call.1} parent=1 // loop_body
      %s20 = ssub.s32 %s15, 1
      %s21 = ssub.s32 %s15, 2
      %s22 = sadd.s32 %s15, 1
      %s23 = ssub.s32 %s15, %s22
      %p24 = scmp.eq.s32.totalorder %s23, 0
      %s26 = sadd.s32 %s25, 1
      %s27 = scalar_select %p24, %s25, %s26
      %p30 = pneg %p24
      %p31 = scmp.eq.s32.totalorder %s15, 1
      %p32 = por %p30, %p31
      %p33 = scmp.ne.s32.totalorder %s25, %s28
      %p34 = scmp.eq.s32.totalorder %s15, 0
      %p35 = por %p33, %p34
      %p36 = scmp.ne.s32.totalorder %s25, %s28
      %p37 = scmp.eq.s32.totalorder %s20, 1
      %p38 = por %p36, %p37
      %p39 = scmp.ne.s32.totalorder %s28, %s29
      %p40 = scmp.eq.s32.totalorder %s20, 0
      %p41 = por %p39, %p40
      %p42 = scmp.ne.s32.totalorder %s28, %s29
      %p43 = scmp.eq.s32.totalorder %s21, 1
      %p44 = por %p42, %p43
      %p46 = scmp.ne.s32.totalorder %s29, %s45
      %p47 = scmp.eq.s32.totalorder %s21, 0
      %p48 = por %p46, %p47
      %s50 = sadd.s32 %s49, 1
      %p53 = scmp.eq.s32.totalorder %s15, 1
      %p54 = scmp.ne.s32.totalorder %s49, %s51
      %p55 = scmp.eq.s32.totalorder %s15, 0
      %p56 = por %p54, %p55
      %p57 = scmp.ne.s32.totalorder %s49, %s51
      %p58 = scmp.eq.s32.totalorder %s20, 1
      %p59 = por %p57, %p58
      %p60 = scmp.ne.s32.totalorder %s51, %s52
      %p61 = scmp.eq.s32.totalorder %s20, 0
      %p62 = por %p60, %p61
      %p63 = scmp.ne.s32.totalorder %s51, %s52
      %p64 = scmp.eq.s32.totalorder %s21, 1
      %p65 = por %p63, %p64
      %p67 = scmp.ne.s32.totalorder %s52, %s66
      %p68 = scmp.eq.s32.totalorder %s21, 0
      %p69 = por %p67, %p68
      %s70 = ssub.s32 %s15, %s22
      %p71 = scmp.eq.s32.totalorder %s70, 0
      %s73 = sadd.s32 %s72, 1
      %s74 = scalar_select %p71, %s72, %s73
      %p77 = pneg %p71
      %p78 = scmp.eq.s32.totalorder %s15, 1
      %p79 = por %p77, %p78
      %p80 = scmp.ne.s32.totalorder %s72, %s75
      %p81 = scmp.eq.s32.totalorder %s15, 0
      %p82 = por %p80, %p81
      %p83 = scmp.ne.s32.totalorder %s72, %s75
      %p84 = scmp.eq.s32.totalorder %s20, 1
      %p85 = por %p83, %p84
      %p86 = scmp.ne.s32.totalorder %s75, %s76
      %p87 = scmp.eq.s32.totalorder %s20, 0
      %p88 = por %p86, %p87
      %p89 = scmp.ne.s32.totalorder %s75, %s76
      %p90 = scmp.eq.s32.totalorder %s21, 1
      %p91 = por %p89, %p90
      %p93 = scmp.ne.s32.totalorder %s76, %s92
      %p94 = scmp.eq.s32.totalorder %s21, 0
      %p95 = por %p93, %p94
      %p96 = scmp.le.s32.totalorder 1, %s15
      %p97 = scmp.lt.s32.totalorder %s15, 3
      %p98 = pnand %p96, %p97
      %p99 = pneg %p98
      // Predicated region
      $region9: #{tpu_custom_call.1} parent=5 // pred_check
        _
      $region10: #{tpu_custom_call.1} parent=5 // pred_check_branch
        %101 = sbr.rel (%p98) target = $region12
      $region11: #{tpu_custom_call.1} parent=5 // pred_region
        %s102 = ssub.s32 %s15, 1
        // Predicated region
        $region13: #{tpu_custom_call.1} parent=11 // pred_check
          %p103 = pneg %p62
        $region14: #{tpu_custom_call.1} parent=11 // pred_check_branch
          %105 = sbr.rel (%p103) target = $region16
        $region15: #{tpu_custom_call.1} parent=11 // pred_region
          %107 = vsyncadd [#allocation6], 0
          %s108 = sshll.u32 %s1, 4
          %s109 = int_to_ptr.hbm [resolvable:$true] %s108
          %s110 = sshll.u32 [#allocation5], 4
          %s111 = int_to_ptr.vmem [resolvable:$true] %s110
          %116 = dma.hbm_to_vmem [thread:$0]  %s109, 1024, %s111, [#allocation6], 64, 64, 4
        $region16: #{tpu_custom_call.1} parent=11 // pred_fallthru
          _
      $region12: #{tpu_custom_call.1} parent=5 // pred_fallthru
        _
      %p117 = scmp.lt.s32.totalorder %s15, 2
      // Predicated region
      $region17: #{tpu_custom_call.1} parent=5 // pred_check
        %p118 = pneg %p117
      $region18: #{tpu_custom_call.1} parent=5 // pred_check_branch
        %120 = sbr.rel (%p118) target = $region20
      $region19: #{tpu_custom_call.1} parent=5 // pred_region
        // Predicated region
        $region21: #{tpu_custom_call.1} parent=19 // pred_check
          %p121 = pneg %p35
        $region22: #{tpu_custom_call.1} parent=19 // pred_check_branch
          %123 = sbr.rel (%p121) target = $region24
        $region23: #{tpu_custom_call.1} parent=19 // pred_region
          %s124 = sand.u32 %s25, 1
          %s125 = scalar_lea.sflag [#allocation3], %s124
          %s126 = sand.u32 %s25, 1
          %s127 = smul.addr %s126, 32
          %s128 = scalar_lea.vmem [#allocation2], %s127
          %s129 = smul.u32 4, %s15
          %131 = vsyncadd %s125, 0
          %s132 = smul.addr %s129, 8
          %s133 = scalar_lea.hbm %s0, %s132
          %s134 = sshll.u32 %s133, 4
          %s135 = int_to_ptr.hbm [resolvable:$true] %s134
          %s136 = sshll.u32 %s128, 4
          %s137 = int_to_ptr.vmem [resolvable:$true] %s136
          %142 = dma.hbm_to_vmem [thread:$0]  %s135, 512, %s137, %s125, 128, 128, 8
        $region24: #{tpu_custom_call.1} parent=19 // pred_fallthru
          _
      $region20: #{tpu_custom_call.1} parent=5 // pred_fallthru
        _
      %p143 = scmp.le.s32.totalorder 1, %s15
      %p144 = scmp.lt.s32.totalorder %s15, 3
      %p145 = pnand %p143, %p144
      %p146 = pneg %p145
      // Predicated region
      $region25: #{tpu_custom_call.1} parent=5 // pred_check
        _
      $region26: #{tpu_custom_call.1} parent=5 // pred_check_branch
        %148 = sbr.rel (%p145) target = $region28
      $region27: #{tpu_custom_call.1} parent=5 // pred_region
        %s149 = ssub.s32 %s15, 1
        %s150 = sand.u32 %s28, 1
        %s151 = scalar_lea.sflag [#allocation3], %s150
        %s152 = sand.u32 %s28, 1
        %s153 = smul.addr %s152, 32
        %s154 = scalar_lea.vmem [#allocation2], %s153
        // Predicated region
        $region29: #{tpu_custom_call.1} parent=27 // pred_check
          %p155 = pneg %p41
        $region30: #{tpu_custom_call.1} parent=27 // pred_check_branch
          %157 = sbr.rel (%p155) target = $region32
        $region31: #{tpu_custom_call.1} parent=27 // pred_region
          %159 = dma.done %s151, 512
        $region32: #{tpu_custom_call.1} parent=27 // pred_fallthru
          _
        // Predicated region
        $region33: #{tpu_custom_call.1} parent=27 // pred_check
          %p160 = pneg %p62
        $region34: #{tpu_custom_call.1} parent=27 // pred_check_branch
          %162 = sbr.rel (%p160) target = $region36
        $region35: #{tpu_custom_call.1} parent=27 // pred_region
          %164 = dma.done [#allocation6], 1024
        $region36: #{tpu_custom_call.1} parent=27 // pred_fallthru
          _
        %s165 = sand.u32 %s28, 1
        %s166 = scalar_lea.sflag [#allocation3], %s165
        %s167 = sand.u32 %s28, 1
        %s168 = smul.addr %s167, 32
        %s169 = scalar_lea.vmem [#allocation2], %s168
        %p170 = pneg %p41
        %p171 = pneg %p38
        %p172 = pneg %p62
        %p173 = pneg %p59
        %p174 = pneg %p88
        %p175 = pneg %p85
        %s176 = sand.u32 %s75, 1
        %s177 = scalar_lea.sflag [#allocation4], %s176
        %s178 = sand.u32 %s75, 1
        %s179 = smul.addr %s178, 32
        %s180 = scalar_lea.vmem [#allocation7], %s179
        %s181 = smul.u32 4, %s20
        %s182 = smul.u32 4, %s20
        %v183 = vld [vmem:[%s154] sm:$0xff]
        %v184 = vld [vmem:[%s154 + $0x8] sm:$0xff]
        %v185 = vld [vmem:[%s154 + $0x10] sm:$0xff]
        %v186 = vld [vmem:[%s154 + $0x18] sm:$0xff]
        %v187 = vpack.c.bf16 %v184, %v183
        %v188 = vpack.c.bf16 %v186, %v185
        %v189 = vld [vmem:[#allocation5] sm:$0xf]
        %v190 = vld [vmem:[#allocation5 + $0x4] sm:$0xf]
        %v191 = vld [vmem:[#allocation5 + $0x8] sm:$0xf]
        %v192 = vld [vmem:[#allocation5 + $0xc] sm:$0xf]
        %v193 = vld [vmem:[#allocation5 + $0x10] sm:$0xf]
        %v194 = vld [vmem:[#allocation5 + $0x14] sm:$0xf]
        %v195 = vld [vmem:[#allocation5 + $0x18] sm:$0xf]
        %v196 = vld [vmem:[#allocation5 + $0x1c] sm:$0xf]
        %v197 = vld [vmem:[#allocation5 + $0x20] sm:$0xf]
        %v198 = vld [vmem:[#allocation5 + $0x24] sm:$0xf]
        %v199 = vld [vmem:[#allocation5 + $0x28] sm:$0xf]
        %v200 = vld [vmem:[#allocation5 + $0x2c] sm:$0xf]
        %v201 = vld [vmem:[#allocation5 + $0x30] sm:$0xf]
        %v202 = vld [vmem:[#allocation5 + $0x34] sm:$0xf]
        %v203 = vld [vmem:[#allocation5 + $0x38] sm:$0xf]
        %v204 = vld [vmem:[#allocation5 + $0x3c] sm:$0xf]
        %v221 = vunpack.c.l.b16 %v189
        %v222 = vunpack.c.l.b16 %v190
        %v223 = vunpack.c.l.b16 %v191
        %v224 = vunpack.c.l.b16 %v192
        %v225 = vunpack.c.l.b16 %v193
        %v226 = vunpack.c.l.b16 %v194
        %v227 = vunpack.c.l.b16 %v195
        %v228 = vunpack.c.l.b16 %v196
        %v229 = vunpack.c.l.b16 %v197
        %v230 = vunpack.c.l.b16 %v198
        %v231 = vunpack.c.l.b16 %v199
        %v232 = vunpack.c.l.b16 %v200
        %v233 = vunpack.c.l.b16 %v201
        %v234 = vunpack.c.l.b16 %v202
        %v235 = vunpack.c.l.b16 %v203
        %v236 = vunpack.c.l.b16 %v204
        %v237 = vpack.c.b16 %v222, %v221
        %v238 = vpack.c.b16 %v224, %v223
        %v239 = vpack.c.b16 %v226, %v225
        %v240 = vpack.c.b16 %v228, %v227
        %v241 = vpack.c.b16 %v230, %v229
        %v242 = vpack.c.b16 %v232, %v231
        %v243 = vpack.c.b16 %v234, %v233
        %v244 = vpack.c.b16 %v236, %v235
        %253 = vmatpush.bf16.msra.mxu0 %v244
        %254 = vmatpush.bf16.msra.mxu0 %v243
        %255 = vmatpush.bf16.msra.mxu0 %v242
        %256 = vmatpush.bf16.msra.mxu0 %v241
        %257 = vmatpush.bf16.msra.mxu0 %v240
        %258 = vmatpush.bf16.msra.mxu0 %v239
        %259 = vmatpush.bf16.msra.mxu0 %v238
        %260 = vmatpush.bf16.msra.mxu0 %v237
        %261 = vmatmul.bf16.gmra.mxu0 %v187
        %v262 = vpop.f32.mrf.mxu0
        %v263 = vadd.f32 0.0, %v262
        %v264 = vpop.f32.mrf.mxu0
        %v265 = vadd.f32 0.0, %v264
        %266 = vmatmul.bf16.gmra.mxu0 %v188
        %v267 = vpop.f32.mrf.mxu0
        %v268 = vadd.f32 0.0, %v267
        %v269 = vpop.f32.mrf.mxu0
        %v270 = vadd.f32 0.0, %v269
        %271 = vdwg.mxu0
        %272 = vst [vmem:[%s180] sm:$0xff] %v263
        %273 = vst [vmem:[%s180 + $0x8] sm:$0xff] %v265
        %274 = vst [vmem:[%s180 + $0x10] sm:$0xff] %v268
        %275 = vst [vmem:[%s180 + $0x18] sm:$0xff] %v270
        %s276 = sand.u32 %s75, 1
        %s277 = scalar_lea.sflag [#allocation4], %s276
        %s278 = sand.u32 %s75, 1
        %s279 = smul.addr %s278, 32
        %s280 = scalar_lea.vmem [#allocation7], %s279
        // Predicated region
        $region37: #{tpu_custom_call.1} parent=27 // pred_check
          %p281 = pneg %p85
        $region38: #{tpu_custom_call.1} parent=27 // pred_check_branch
          %283 = sbr.rel (%p281) target = $region40
        $region39: #{tpu_custom_call.1} parent=27 // pred_region
          %s284 = smul.u32 4, %s20
          %286 = vsyncadd %s277, 0
          %s287 = smul.addr %s284, 8
          %s288 = scalar_lea.hbm %s2, %s287
          %s289 = sshll.u32 %s280, 4
          %s290 = int_to_ptr.vmem [resolvable:$true] %s289
          %s291 = sshll.u32 %s288, 4
          %s292 = int_to_ptr.hbm [resolvable:$true] %s291
          %297 = dma.vmem_to_hbm [thread:$0]  %s290, 512, %s292, %s277, 128, 128, 8
        $region40: #{tpu_custom_call.1} parent=27 // pred_fallthru
          _
      $region28: #{tpu_custom_call.1} parent=5 // pred_fallthru
        _
      %p298 = scmp.le.s32.totalorder 2, %s15
      // Predicated region
      $region41: #{tpu_custom_call.1} parent=5 // pred_check
        %p299 = pneg %p298
      $region42: #{tpu_custom_call.1} parent=5 // pred_check_branch
        %301 = sbr.rel (%p299) target = $region44
      $region43: #{tpu_custom_call.1} parent=5 // pred_region
        %s302 = ssub.s32 %s15, 2
        // Predicated region
        $region45: #{tpu_custom_call.1} parent=43 // pred_check
          %p303 = pneg %p91
        $region46: #{tpu_custom_call.1} parent=43 // pred_check_branch
          %305 = sbr.rel (%p303) target = $region48
        $region47: #{tpu_custom_call.1} parent=43 // pred_region
          %s306 = sand.u32 %s76, 1
          %s307 = scalar_lea.sflag [#allocation4], %s306
          %s308 = sand.u32 %s76, 1
          %s309 = smul.addr %s308, 32
          %s310 = scalar_lea.vmem [#allocation7], %s309
          %312 = dma.done %s307, 512
        $region48: #{tpu_custom_call.1} parent=43 // pred_fallthru
          _
      $region44: #{tpu_custom_call.1} parent=5 // pred_fallthru
        _
    $region6: #{tpu_custom_call.1} parent=1 // loop_footer
      %s19 = sadd.s32 1, %s15
    $region7: #{tpu_custom_call.1} parent=1 // loop_footer_branch
      %14 = sbr.rel target = $region3
    $region8: #{tpu_custom_call.1} parent=1 // loop_exit
      _
    %313 = vsyncpa [#allocation3], 1
    %s314 = scalar_lea.sflag [#allocation3], 1
    %315 = vsyncpa %s314, 1
    %316 = vsyncpa [#allocation6], 1
    %317 = vsyncpa [#allocation4], 1
    %s318 = scalar_lea.sflag [#allocation4], 1
    %319 = vsyncpa %s318, 1

</llo_original>
